<compile_context>
chip_gen: v6e
topology: v6e:2x2x1
jax: 0.10.0
libtpu: 0.0.40
codegen_flags: <defaults>
</compile_context>

<pallas_src>
import jax
import jax.numpy as jnp
from jax.experimental import pallas as pl
from jax.experimental.pallas import tpu as pltpu


def baseline_mlp_kernel(xT_ref, w1t_ref, b1_ref, w2t_ref, b2_ref, w3_ref, b3_ref, o_ref):
    """Fused 2-hidden-layer MLP + scalar head, transposed orientation.

    xT_ref  : (D, TB)  observation tile, transposed (batch on lanes)
    w1t_ref : (H, D)   layer-1 weight (transposed), b1_ref (H, 1)
    w2t_ref : (H, H)   layer-2 weight (transposed), b2_ref (H, 1)
    w3_ref  : (H, 1)   output weight column,        b3_ref (1, 1)
    o_ref   : (1, TB)  baseline value per observation (lane-dense row)
    """
    # hidden layer 1: ReLU(W1^T x + b1)   -- MXU (f32 accumulate), VPU math in f32
    h = jnp.dot(w1t_ref[...], xT_ref[...], preferred_element_type=jnp.float32)
    h = jnp.maximum(h + b1_ref[...], 0.0)                       # (H, TB) f32

    # hidden layer 2: ReLU(W2^T h + b2)
    h = jnp.dot(w2t_ref[...], h.astype(w2t_ref.dtype),
                preferred_element_type=jnp.float32)
    h = jnp.maximum(h + b2_ref[...], 0.0)                       # (H, TB) f32

    # scalar head (out_features = 1): sublane reduction -> lane-dense (1, TB) row
    out = jnp.sum(h * w3_ref[...], axis=0, keepdims=True) + b3_ref[...]
    o_ref[...] = out.astype(o_ref.dtype)


def baseline_forward(obs, w1, b1, w2, b2, w3, b3, *, tb=256, mxu_dtype=jnp.bfloat16):
    """Pallas wrapper. obs: [B, D] float32. Returns baseline values [B] (squeezed)."""
    B, D = obs.shape
    H = w1.shape[1]

    n_tiles = pl.cdiv(B, tb)
    B_pad = n_tiles * tb
    if B_pad != B:                                   # ragged batch -> zero-pad tail
        obs = jnp.pad(obs, ((0, B_pad - B), (0, 0)))

    # Layout plumbing in the wrapper: batch on the lane axis, weights pre-transposed
    # so the kernel does W^T x (== PyTorch x @ W.T with W [out, in]).
    obs_t = obs.T.astype(mxu_dtype)                  # (D, B_pad)
    w1t = w1.T.astype(mxu_dtype)                     # (H, D)
    w2t = w2.T.astype(mxu_dtype)                     # (H, H)
    b1c = b1.reshape(H, 1).astype(jnp.float32)
    b2c = b2.reshape(H, 1).astype(jnp.float32)
    w3c = w3.reshape(H, 1).astype(jnp.float32)
    b3r = b3.reshape(1, 1).astype(jnp.float32)

    itemsize = obs_t.dtype.itemsize
    cost = pl.CostEstimate(
        flops=2 * B_pad * (D * H + H * H + H),
        transcendentals=0,
        bytes_accessed=(obs_t.size * itemsize
                        + (w1t.size + w2t.size) * itemsize
                        + (3 * H + 1) * 4          # biases + head weight
                        + B_pad * 4),              # output row
    )

    out = pl.pallas_call(
        baseline_mlp_kernel,
        out_shape=jax.ShapeDtypeStruct((1, B_pad), jnp.float32),
        grid_spec=pltpu.PrefetchScalarGridSpec(
            num_scalar_prefetch=0,
            grid=(n_tiles,),
            in_specs=[
                pl.BlockSpec((D, tb), lambda i: (0, i)),   # obs tile (transposed)
                pl.BlockSpec((H, D), lambda i: (0, 0)),    # W1^T (VMEM-resident)
                pl.BlockSpec((H, 1), lambda i: (0, 0)),    # b1
                pl.BlockSpec((H, H), lambda i: (0, 0)),    # W2^T
                pl.BlockSpec((H, 1), lambda i: (0, 0)),    # b2
                pl.BlockSpec((H, 1), lambda i: (0, 0)),    # w3 column
                pl.BlockSpec((1, 1), lambda i: (0, 0)),    # b3
            ],
            out_specs=pl.BlockSpec((1, tb), lambda i: (0, i)),   # lane-dense output
        ),
        compiler_params=pltpu.CompilerParams(
            dimension_semantics=("parallel",),
        ),
        cost_estimate=cost,
    )(obs_t, w1t, b1c, w2t, b2c, w3c, b3r)

    # nn.Module.forward squeezes to 1-D: shape [batch]
    output = out.reshape(B_pad)[:B]
    assert output.ndim == 1
    return output


def baseline_forward_ref(obs, w1, b1, w2, b2, w3, b3):
    """Pure-JAX reference of the same MLP (for correctness check)."""
    h = jnp.maximum(obs @ w1 + b1, 0.0)
    h = jnp.maximum(h @ w2 + b2, 0.0)
    return (h @ w3 + b3).reshape(-1)


if __name__ == "__main__":
    # Small model dims consistent with the module (obs_dim=16, layer_size=32,
    # n_layers=2); batch big enough to fill lanes and give >=2 grid steps.
    B, D, H = 512, 16, 32

    key = jax.random.PRNGKey(0)
    k_obs, k1, k2, k3, kb1, kb2, kb3 = jax.random.split(key, 7)

    obs = jax.random.normal(k_obs, (B, D), dtype=jnp.float32)

    # Deterministic parameter init (small random weights, zero-ish biases).
    w1 = 0.1 * jax.random.normal(k1, (D, H), dtype=jnp.float32)
    b1 = 0.01 * jax.random.normal(kb1, (H,), dtype=jnp.float32)
    w2 = 0.1 * jax.random.normal(k2, (H, H), dtype=jnp.float32)
    b2 = 0.01 * jax.random.normal(kb2, (H,), dtype=jnp.float32)
    w3 = 0.1 * jax.random.normal(k3, (H, 1), dtype=jnp.float32)
    b3 = 0.01 * jax.random.normal(kb3, (1,), dtype=jnp.float32)

    ref = baseline_forward_ref(obs, w1, b1, w2, b2, w3, b3)

    # Exact-dtype path (f32 MXU operands): tight structural correctness check.
    out_f32 = baseline_forward(obs, w1, b1, w2, b2, w3, b3, mxu_dtype=jnp.float32)
    out_f32 = jax.block_until_ready(out_f32)
    assert out_f32.shape == (B,) and out_f32.ndim == 1
    assert jnp.allclose(out_f32, ref, atol=2e-3, rtol=2e-3)

    # Perf-default path (bf16 MXU operands, f32 accumulation on the MXU).
    out = baseline_forward(obs, w1, b1, w2, b2, w3, b3)
    out = jax.block_until_ready(out)
    assert out.shape == (B,) and out.ndim == 1
    assert jnp.allclose(out, ref, atol=3e-2, rtol=3e-2)

    # TODO(synk): calculate_advantage / update_baseline are host-side training
    # logic (MSE loss + optimizer step); only the forward pass is kernelized.
    print("KERNEL_OK")
</pallas_src>

<mosaic_0001>
module attributes {stable_mosaic.version = 11 : i64} {
  func.func @baseline_mlp_kernel(%arg0: i32, %arg1: memref<16x256xf32, #tpu.memory_space<vmem>>, %arg2: memref<32x16xf32, #tpu.memory_space<vmem>>, %arg3: memref<32x1xf32, #tpu.memory_space<vmem>>, %arg4: memref<32x32xf32, #tpu.memory_space<vmem>>, %arg5: memref<32x1xf32, #tpu.memory_space<vmem>>, %arg6: memref<32x1xf32, #tpu.memory_space<vmem>>, %arg7: memref<1x1xf32, #tpu.memory_space<vmem>>, %arg8: memref<1x256xf32, #tpu.memory_space<vmem>>) attributes {dimension_semantics = [#tpu.dimension_semantics<parallel>], iteration_bounds = array<i64: 2>, scalar_prefetch = 0 : i64, scratch_operands = 0 : i64, tpu.core_type = #tpu.core_type<tc>, window_params = [{transform_indices = @transform_0, window_bounds = array<i64: 16, 256>}, {pipeline_mode = #tpu.pipeline_mode<synchronous>, transform_indices = @transform_1, window_bounds = array<i64: 32, 16>}, {pipeline_mode = #tpu.pipeline_mode<synchronous>, transform_indices = @transform_2, window_bounds = array<i64: 32, 1>}, {pipeline_mode = #tpu.pipeline_mode<synchronous>, transform_indices = @transform_3, window_bounds = array<i64: 32, 32>}, {pipeline_mode = #tpu.pipeline_mode<synchronous>, transform_indices = @transform_4, window_bounds = array<i64: 32, 1>}, {pipeline_mode = #tpu.pipeline_mode<synchronous>, transform_indices = @transform_5, window_bounds = array<i64: 32, 1>}, {pipeline_mode = #tpu.pipeline_mode<synchronous>, transform_indices = @transform_6, window_bounds = array<i64: 1, 1>}, {transform_indices = @transform_7, window_bounds = array<i64: 1, 256>}]} {
    %c0 = arith.constant 0 : index
    %c0_0 = arith.constant 0 : index
    %0 = vector.load %arg2[%c0, %c0_0] : memref<32x16xf32, #tpu.memory_space<vmem>>, vector<32x16xf32>
    %c0_1 = arith.constant 0 : index
    %c0_2 = arith.constant 0 : index
    %1 = vector.load %arg1[%c0_1, %c0_2] : memref<16x256xf32, #tpu.memory_space<vmem>>, vector<16x256xf32>
    %cst = arith.constant dense<0.000000e+00> : vector<32x256xf32>
    %2 = tpu.matmul %0, %1, %cst {dimension_numbers = #tpu.dot_dimension_numbers<[1], [0], [0], [1], [0, 0, 1, 1], [], []>} : vector<32x16xf32>, vector<16x256xf32>, vector<32x256xf32> -> vector<32x256xf32>
    %c0_3 = arith.constant 0 : index
    %c0_4 = arith.constant 0 : index
    %3 = vector.load %arg3[%c0_3, %c0_4] : memref<32x1xf32, #tpu.memory_space<vmem>>, vector<32x1xf32>
    %4 = vector.broadcast %3 : vector<32x1xf32> to vector<32x256xf32>
    %5 = arith.addf %2, %4 : vector<32x256xf32>
    %cst_5 = arith.constant 0.000000e+00 : f32
    %6 = vector.broadcast %cst_5 : f32 to vector<32x256xf32>
    %7 = arith.maximumf %5, %6 : vector<32x256xf32>
    %c0_6 = arith.constant 0 : index
    %c0_7 = arith.constant 0 : index
    %8 = vector.load %arg4[%c0_6, %c0_7] : memref<32x32xf32, #tpu.memory_space<vmem>>, vector<32x32xf32>
    %cst_8 = arith.constant dense<0.000000e+00> : vector<32x256xf32>
    %9 = tpu.matmul %8, %7, %cst_8 {dimension_numbers = #tpu.dot_dimension_numbers<[1], [0], [0], [1], [0, 0, 1, 1], [], []>} : vector<32x32xf32>, vector<32x256xf32>, vector<32x256xf32> -> vector<32x256xf32>
    %c0_9 = arith.constant 0 : index
    %c0_10 = arith.constant 0 : index
    %10 = vector.load %arg5[%c0_9, %c0_10] : memref<32x1xf32, #tpu.memory_space<vmem>>, vector<32x1xf32>
    %11 = vector.broadcast %10 : vector<32x1xf32> to vector<32x256xf32>
    %12 = arith.addf %9, %11 : vector<32x256xf32>
    %cst_11 = arith.constant 0.000000e+00 : f32
    %13 = vector.broadcast %cst_11 : f32 to vector<32x256xf32>
    %14 = arith.maximumf %12, %13 : vector<32x256xf32>
    %c0_12 = arith.constant 0 : index
    %c0_13 = arith.constant 0 : index
    %15 = vector.load %arg6[%c0_12, %c0_13] : memref<32x1xf32, #tpu.memory_space<vmem>>, vector<32x1xf32>
    %16 = vector.broadcast %15 : vector<32x1xf32> to vector<32x256xf32>
    %17 = arith.mulf %14, %16 : vector<32x256xf32>
    %cst_14 = arith.constant dense<0.000000e+00> : vector<256xf32>
    %18 = vector.multi_reduction <add>, %17, %cst_14 [0] : vector<32x256xf32> to vector<256xf32>
    %19 = vector.shape_cast %18 : vector<256xf32> to vector<1x256xf32>
    %c0_15 = arith.constant 0 : index
    %c0_16 = arith.constant 0 : index
    %20 = vector.load %arg7[%c0_15, %c0_16] : memref<1x1xf32, #tpu.memory_space<vmem>>, vector<1x1xf32>
    %21 = vector.broadcast %20 : vector<1x1xf32> to vector<1x256xf32>
    %22 = arith.addf %19, %21 : vector<1x256xf32>
    %c0_17 = arith.constant 0 : index
    %c0_18 = arith.constant 0 : index
    %23 = vector.load %arg8[%c0_17, %c0_18] : memref<1x256xf32, #tpu.memory_space<vmem>>, vector<1x256xf32>
    tpu.vector_store %arg8[%c0_17, %c0_18], %22 {strides = array<i32>} : memref<1x256xf32, #tpu.memory_space<vmem>>, vector<1x256xf32>,
    return
  }
  func.func @transform_0(%arg0: i32) -> (i32, i32) {
    %c0_i32 = arith.constant 0 : i32
    %c0_i32_0 = arith.constant 0 : i32
    return %c0_i32, %arg0 : i32, i32
  }
  func.func @transform_1(%arg0: i32) -> (i32, i32) {
    %c0_i32 = arith.constant 0 : i32
    %c0_i32_0 = arith.constant 0 : i32
    %c0_i32_1 = arith.constant 0 : i32
    return %c0_i32, %c0_i32_0 : i32, i32
  }
  func.func @transform_2(%arg0: i32) -> (i32, i32) {
    %c0_i32 = arith.constant 0 : i32
    %c0_i32_0 = arith.constant 0 : i32
    %c0_i32_1 = arith.constant 0 : i32
    return %c0_i32, %c0_i32_0 : i32, i32
  }
  func.func @transform_3(%arg0: i32) -> (i32, i32) {
    %c0_i32 = arith.constant 0 : i32
    %c0_i32_0 = arith.constant 0 : i32
    %c0_i32_1 = arith.constant 0 : i32
    return %c0_i32, %c0_i32_0 : i32, i32
  }
  func.func @transform_4(%arg0: i32) -> (i32, i32) {
    %c0_i32 = arith.constant 0 : i32
    %c0_i32_0 = arith.constant 0 : i32
    %c0_i32_1 = arith.constant 0 : i32
    return %c0_i32, %c0_i32_0 : i32, i32
  }
  func.func @transform_5(%arg0: i32) -> (i32, i32) {
    %c0_i32 = arith.constant 0 : i32
    %c0_i32_0 = arith.constant 0 : i32
    %c0_i32_1 = arith.constant 0 : i32
    return %c0_i32, %c0_i32_0 : i32, i32
  }
  func.func @transform_6(%arg0: i32) -> (i32, i32) {
    %c0_i32 = arith.constant 0 : i32
    %c0_i32_0 = arith.constant 0 : i32
    %c0_i32_1 = arith.constant 0 : i32
    return %c0_i32, %c0_i32_0 : i32, i32
  }
  func.func @transform_7(%arg0: i32) -> (i32, i32) {
    %c0_i32 = arith.constant 0 : i32
    %c0_i32_0 = arith.constant 0 : i32
    return %c0_i32, %arg0 : i32, i32
  }
}

</mosaic_0001>

<llo_original>
// kernel: tpu_custom_call.1
$region0: #{tpu_custom_call.1}
  #allocation0 [shape = 'u32[]', space=smem, size = 0x4, offset = 0x4, fixed_abs, tag = 'smem constant byte address 0x4 - core index']
  #allocation1 [shape = 'u32[144,128]{1,0:T(1,128)}', space=vmem, size = 0x12000, scoped, tag = 'internal scratch']
  #allocation2 [shape = 'f32[1,1]{1,0:T(1,128)S(1)}', space=vmem, size = 0x200, scoped, tag = 'scoped memory for tpu_custom_call.1']
  %s0 = inlined_call_operand.vmem [shape: f32[16,512], index: 0, kind: input, shape index: {}]
  %s1 = inlined_call_operand.vmem [shape: f32[32,16], index: 1, kind: input, shape index: {}]
  %s2 = inlined_call_operand.vmem [shape: f32[32,1], index: 2, kind: input, shape index: {}]
  %s3 = inlined_call_operand.vmem [shape: f32[32,32], index: 3, kind: input, shape index: {}]
  %s4 = inlined_call_operand.vmem [shape: f32[32,1], index: 4, kind: input, shape index: {}]
  %s5 = inlined_call_operand.vmem [shape: f32[32,1], index: 5, kind: input, shape index: {}]
  %s6 = inlined_call_operand.<no memory space> [shape: f32[1,1], index: 6, kind: input, shape index: {}]
  %s7 = inlined_call_operand.hbm [shape: f32[1,512], index: 7, kind: output, shape index: {}]
  %s8 = sld [smem:[#allocation0]]
  $region84: #{tpu_custom_call.1} parent=0
    _
  %s10 = ssub.s32 1, %s8
  %s11 = scalar_select 0, %s10, %s8
  %v12 = vstv %s6
  %13 = vst [vmem:[#allocation2] sm:$0x1] %v12
  $region1: #{tpu_custom_call.1} parent=0
    #allocation3 [shape = 'u8[32768]{0}', space=vmem, size = 0x8000, scoped, tag = 'input window, operand 0']
    #allocation4 [shape = 'u8[2048]{0}', space=vmem, size = 0x800, scoped, tag = 'output window, operand 0']
    #allocation5 [shape = 's32[2]{0}', space=sflag, size = 0x8, scoped, tag = 'scoped memory for tpu_custom_call.1']
    %14 = vsyncpa [#allocation5], 0
    %s15 = scalar_lea.sflag [#allocation5], 1
    %16 = vsyncpa %s15, 0
    loop: start=0, step=1, limit=4
    $region2: #{tpu_custom_call.1} parent=1 // loop_pre_header
      _
    $region3: #{tpu_custom_call.1} parent=1 // loop_header
      %s18 = sphi 0, %s22
      %p19 = scmp.ge.s32.totalorder %s18, 4
      %s28 = sphi 0, %s30
      %s31 = sphi 0, %s28
      %s32 = sphi 0, %s31
      %s48 = sphi 0, %s32
      %s52 = sphi 0, %s52
      %s54 = sphi 0, %s52
      %s55 = sphi 0, %s54
      %s69 = sphi 0, %s55
      %s73 = sphi 0, %s73
      %s75 = sphi 0, %s73
      %s76 = sphi 0, %s75
      %s90 = sphi 0, %s76
      %s94 = sphi 0, %s94
      %s96 = sphi 0, %s94
      %s97 = sphi 0, %s96
      %s111 = sphi 0, %s97
      %s115 = sphi 0, %s115
      %s117 = sphi 0, %s115
      %s118 = sphi 0, %s117
      %s132 = sphi 0, %s118
      %s136 = sphi 0, %s136
      %s138 = sphi 0, %s136
      %s139 = sphi 0, %s138
      %s153 = sphi 0, %s139
      %s157 = sphi 0, %s157
      %s159 = sphi 0, %s157
      %s160 = sphi 0, %s159
      %s174 = sphi 0, %s160
      %s180 = sphi 0, %s182
      %s183 = sphi 0, %s180
      %s184 = sphi 0, %s183
      %s200 = sphi 0, %s184
    $region4: #{tpu_custom_call.1} parent=1 // loop_header_branch
      %21 = sbr.rel (%p19) target = $region8
    $region5: #{tpu_custom_call.1} parent=1 // loop_body
      %s23 = ssub.s32 %s18, 1
      %s24 = ssub.s32 %s18, 2
      %s25 = sadd.s32 %s18, 1
      %s26 = ssub.s32 %s18, %s25
      %p27 = scmp.eq.s32.totalorder %s26, 0
      %s29 = sadd.s32 %s28, 1
      %s30 = scalar_select %p27, %s28, %s29
      %p33 = pneg %p27
      %p34 = scmp.eq.s32.totalorder %s18, 1
      %p35 = por %p33, %p34
      %p36 = scmp.ne.s32.totalorder %s28, %s31
      %p37 = scmp.eq.s32.totalorder %s18, 0
      %p38 = por %p36, %p37
      %p39 = scmp.ne.s32.totalorder %s28, %s31
      %p40 = scmp.eq.s32.totalorder %s23, 1
      %p41 = por %p39, %p40
      %p42 = scmp.ne.s32.totalorder %s31, %s32
      %p43 = scmp.eq.s32.totalorder %s23, 0
      %p44 = por %p42, %p43
      %p45 = scmp.ne.s32.totalorder %s31, %s32
      %p46 = scmp.eq.s32.totalorder %s24, 1
      %p47 = por %p45, %p46
      %p49 = scmp.ne.s32.totalorder %s32, %s48
      %p50 = scmp.eq.s32.totalorder %s24, 0
      %p51 = por %p49, %p50
      %s53 = sadd.s32 %s52, 1
      %p56 = scmp.eq.s32.totalorder %s18, 1
      %p57 = scmp.ne.s32.totalorder %s52, %s54
      %p58 = scmp.eq.s32.totalorder %s18, 0
      %p59 = por %p57, %p58
      %p60 = scmp.ne.s32.totalorder %s52, %s54
      %p61 = scmp.eq.s32.totalorder %s23, 1
      %p62 = por %p60, %p61
      %p63 = scmp.ne.s32.totalorder %s54, %s55
      %p64 = scmp.eq.s32.totalorder %s23, 0
      %p65 = por %p63, %p64
      %p66 = scmp.ne.s32.totalorder %s54, %s55
      %p67 = scmp.eq.s32.totalorder %s24, 1
      %p68 = por %p66, %p67
      %p70 = scmp.ne.s32.totalorder %s55, %s69
      %p71 = scmp.eq.s32.totalorder %s24, 0
      %p72 = por %p70, %p71
      %s74 = sadd.s32 %s73, 1
      %p77 = scmp.eq.s32.totalorder %s18, 1
      %p78 = scmp.ne.s32.totalorder %s73, %s75
      %p79 = scmp.eq.s32.totalorder %s18, 0
      %p80 = por %p78, %p79
      %p81 = scmp.ne.s32.totalorder %s73, %s75
      %p82 = scmp.eq.s32.totalorder %s23, 1
      %p83 = por %p81, %p82
      %p84 = scmp.ne.s32.totalorder %s75, %s76
      %p85 = scmp.eq.s32.totalorder %s23, 0
      %p86 = por %p84, %p85
      %p87 = scmp.ne.s32.totalorder %s75, %s76
      %p88 = scmp.eq.s32.totalorder %s24, 1
      %p89 = por %p87, %p88
      %p91 = scmp.ne.s32.totalorder %s76, %s90
      %p92 = scmp.eq.s32.totalorder %s24, 0
      %p93 = por %p91, %p92
      %s95 = sadd.s32 %s94, 1
      %p98 = scmp.eq.s32.totalorder %s18, 1
      %p99 = scmp.ne.s32.totalorder %s94, %s96
      %p100 = scmp.eq.s32.totalorder %s18, 0
      %p101 = por %p99, %p100
      %p102 = scmp.ne.s32.totalorder %s94, %s96
      %p103 = scmp.eq.s32.totalorder %s23, 1
      %p104 = por %p102, %p103
      %p105 = scmp.ne.s32.totalorder %s96, %s97
      %p106 = scmp.eq.s32.totalorder %s23, 0
      %p107 = por %p105, %p106
      %p108 = scmp.ne.s32.totalorder %s96, %s97
      %p109 = scmp.eq.s32.totalorder %s24, 1
      %p110 = por %p108, %p109
      %p112 = scmp.ne.s32.totalorder %s97, %s111
      %p113 = scmp.eq.s32.totalorder %s24, 0
      %p114 = por %p112, %p113
      %s116 = sadd.s32 %s115, 1
      %p119 = scmp.eq.s32.totalorder %s18, 1
      %p120 = scmp.ne.s32.totalorder %s115, %s117
      %p121 = scmp.eq.s32.totalorder %s18, 0
      %p122 = por %p120, %p121
      %p123 = scmp.ne.s32.totalorder %s115, %s117
      %p124 = scmp.eq.s32.totalorder %s23, 1
      %p125 = por %p123, %p124
      %p126 = scmp.ne.s32.totalorder %s117, %s118
      %p127 = scmp.eq.s32.totalorder %s23, 0
      %p128 = por %p126, %p127
      %p129 = scmp.ne.s32.totalorder %s117, %s118
      %p130 = scmp.eq.s32.totalorder %s24, 1
      %p131 = por %p129, %p130
      %p133 = scmp.ne.s32.totalorder %s118, %s132
      %p134 = scmp.eq.s32.totalorder %s24, 0
      %p135 = por %p133, %p134
      %s137 = sadd.s32 %s136, 1
      %p140 = scmp.eq.s32.totalorder %s18, 1
      %p141 = scmp.ne.s32.totalorder %s136, %s138
      %p142 = scmp.eq.s32.totalorder %s18, 0
      %p143 = por %p141, %p142
      %p144 = scmp.ne.s32.totalorder %s136, %s138
      %p145 = scmp.eq.s32.totalorder %s23, 1
      %p146 = por %p144, %p145
      %p147 = scmp.ne.s32.totalorder %s138, %s139
      %p148 = scmp.eq.s32.totalorder %s23, 0
      %p149 = por %p147, %p148
      %p150 = scmp.ne.s32.totalorder %s138, %s139
      %p151 = scmp.eq.s32.totalorder %s24, 1
      %p152 = por %p150, %p151
      %p154 = scmp.ne.s32.totalorder %s139, %s153
      %p155 = scmp.eq.s32.totalorder %s24, 0
      %p156 = por %p154, %p155
      %s158 = sadd.s32 %s157, 1
      %p161 = scmp.eq.s32.totalorder %s18, 1
      %p162 = scmp.ne.s32.totalorder %s157, %s159
      %p163 = scmp.eq.s32.totalorder %s18, 0
      %p164 = por %p162, %p163
      %p165 = scmp.ne.s32.totalorder %s157, %s159
      %p166 = scmp.eq.s32.totalorder %s23, 1
      %p167 = por %p165, %p166
      %p168 = scmp.ne.s32.totalorder %s159, %s160
      %p169 = scmp.eq.s32.totalorder %s23, 0
      %p170 = por %p168, %p169
      %p171 = scmp.ne.s32.totalorder %s159, %s160
      %p172 = scmp.eq.s32.totalorder %s24, 1
      %p173 = por %p171, %p172
      %p175 = scmp.ne.s32.totalorder %s160, %s174
      %p176 = scmp.eq.s32.totalorder %s24, 0
      %p177 = por %p175, %p176
      %s178 = ssub.s32 %s18, %s25
      %p179 = scmp.eq.s32.totalorder %s178, 0
      %s181 = sadd.s32 %s180, 1
      %s182 = scalar_select %p179, %s180, %s181
      %p185 = pneg %p179
      %p186 = scmp.eq.s32.totalorder %s18, 1
      %p187 = por %p185, %p186
      %p188 = scmp.ne.s32.totalorder %s180, %s183
      %p189 = scmp.eq.s32.totalorder %s18, 0
      %p190 = por %p188, %p189
      %p191 = scmp.ne.s32.totalorder %s180, %s183
      %p192 = scmp.eq.s32.totalorder %s23, 1
      %p193 = por %p191, %p192
      %p194 = scmp.ne.s32.totalorder %s183, %s184
      %p195 = scmp.eq.s32.totalorder %s23, 0
      %p196 = por %p194, %p195
      %p197 = scmp.ne.s32.totalorder %s183, %s184
      %p198 = scmp.eq.s32.totalorder %s24, 1
      %p199 = por %p197, %p198
      %p201 = scmp.ne.s32.totalorder %s184, %s200
      %p202 = scmp.eq.s32.totalorder %s24, 0
      %p203 = por %p201, %p202
      %p204 = scmp.le.s32.totalorder 1, %s18
      %p205 = scmp.lt.s32.totalorder %s18, 3
      %p206 = pnand %p204, %p205
      %p207 = pneg %p206
      // Predicated region
      $region9: #{tpu_custom_call.1} parent=5 // pred_check
        _
      $region10: #{tpu_custom_call.1} parent=5 // pred_check_branch
        %209 = sbr.rel (%p206) target = $region12
      $region11: #{tpu_custom_call.1} parent=5 // pred_region
        %s210 = ssub.s32 %s18, 1
        // Predicated region
        $region13: #{tpu_custom_call.1} parent=11 // pred_check
          %p211 = pneg %p65
        $region14: #{tpu_custom_call.1} parent=11 // pred_check_branch
          %213 = sbr.rel (%p211) target = $region16
        $region15: #{tpu_custom_call.1} parent=11 // pred_region
          _
        $region16: #{tpu_custom_call.1} parent=11 // pred_fallthru
          _
        // Predicated region
        $region17: #{tpu_custom_call.1} parent=11 // pred_check
          %p214 = pneg %p86
        $region18: #{tpu_custom_call.1} parent=11 // pred_check_branch
          %216 = sbr.rel (%p214) target = $region20
        $region19: #{tpu_custom_call.1} parent=11 // pred_region
          _
        $region20: #{tpu_custom_call.1} parent=11 // pred_fallthru
          _
        // Predicated region
        $region21: #{tpu_custom_call.1} parent=11 // pred_check
          %p217 = pneg %p107
        $region22: #{tpu_custom_call.1} parent=11 // pred_check_branch
          %219 = sbr.rel (%p217) target = $region24
        $region23: #{tpu_custom_call.1} parent=11 // pred_region
          _
        $region24: #{tpu_custom_call.1} parent=11 // pred_fallthru
          _
        // Predicated region
        $region25: #{tpu_custom_call.1} parent=11 // pred_check
          %p220 = pneg %p128
        $region26: #{tpu_custom_call.1} parent=11 // pred_check_branch
          %222 = sbr.rel (%p220) target = $region28
        $region27: #{tpu_custom_call.1} parent=11 // pred_region
          _
        $region28: #{tpu_custom_call.1} parent=11 // pred_fallthru
          _
        // Predicated region
        $region29: #{tpu_custom_call.1} parent=11 // pred_check
          %p223 = pneg %p149
        $region30: #{tpu_custom_call.1} parent=11 // pred_check_branch
          %225 = sbr.rel (%p223) target = $region32
        $region31: #{tpu_custom_call.1} parent=11 // pred_region
          _
        $region32: #{tpu_custom_call.1} parent=11 // pred_fallthru
          _
        // Predicated region
        $region33: #{tpu_custom_call.1} parent=11 // pred_check
          %p226 = pneg %p170
        $region34: #{tpu_custom_call.1} parent=11 // pred_check_branch
          %228 = sbr.rel (%p226) target = $region36
        $region35: #{tpu_custom_call.1} parent=11 // pred_region
          _
        $region36: #{tpu_custom_call.1} parent=11 // pred_fallthru
          _
      $region12: #{tpu_custom_call.1} parent=5 // pred_fallthru
        _
      %p229 = scmp.lt.s32.totalorder %s18, 2
      // Predicated region
      $region37: #{tpu_custom_call.1} parent=5 // pred_check
        %p230 = pneg %p229
      $region38: #{tpu_custom_call.1} parent=5 // pred_check_branch
        %232 = sbr.rel (%p230) target = $region40
      $region39: #{tpu_custom_call.1} parent=5 // pred_region
        // Predicated region
        $region41: #{tpu_custom_call.1} parent=39 // pred_check
          %p233 = pneg %p38
        $region42: #{tpu_custom_call.1} parent=39 // pred_check_branch
          %235 = sbr.rel (%p233) target = $region44
        $region43: #{tpu_custom_call.1} parent=39 // pred_region
          %s236 = sand.u32 %s28, 1
          %s237 = sand.u32 %s28, 1
          %s238 = smul.addr %s237, 32
          %s239 = scalar_lea.vmem [#allocation3], %s238
          %s240 = smul.u32 2, %s18
          %s241 = smul.addr %s240, 8
          %s242 = scalar_lea.vmem %s0, %s241
          // Predicated region
          $region45: #{tpu_custom_call.1} parent=43 // pred_check
            _
          $region46: #{tpu_custom_call.1} parent=43 // pred_check_branch
            %244 = sbr.rel (0) target = $region48
          $region47: #{tpu_custom_call.1} parent=43 // pred_region
            // Predicated region
            $region49: #{tpu_custom_call.1} parent=47 // pred_check
              _
            $region50: #{tpu_custom_call.1} parent=47 // pred_check_branch
              %246 = sbr.rel (0) target = $region52
            $region51: #{tpu_custom_call.1} parent=47 // pred_region
              loop: start=0, step=1, limit=1
              $region53: #{tpu_custom_call.1} parent=51 // loop_pre_header
                _
              $region54: #{tpu_custom_call.1} parent=51 // loop_header
                %s248 = sphi 0, %s252
                %p249 = scmp.ge.s32.totalorder %s248, 1
                %s253 = sphi %s242, %s242
                %s254 = sphi %s239, %s239
              $region55: #{tpu_custom_call.1} parent=51 // loop_header_branch
                %251 = sbr.rel (%p249) target = $region59
              $region56: #{tpu_custom_call.1} parent=51 // loop_body
                %v255 = vld [vmem:[%s253] sm:$0xff]
                %256 = vst [vmem:[%s254] sm:$0xff] %v255
                %v257 = vld [vmem:[%s253 + $0x8] sm:$0xff]
                %258 = vst [vmem:[%s254 + $0x8] sm:$0xff] %v257
                %v259 = vld [vmem:[%s253 + $0x20] sm:$0xff]
                %260 = vst [vmem:[%s254 + $0x10] sm:$0xff] %v259
                %v261 = vld [vmem:[%s253 + $0x28] sm:$0xff]
                %262 = vst [vmem:[%s254 + $0x18] sm:$0xff] %v261
              $region57: #{tpu_custom_call.1} parent=51 // loop_footer
                %s252 = sadd.s32 1, %s248
              $region58: #{tpu_custom_call.1} parent=51 // loop_footer_branch
                %247 = sbr.rel target = $region54
              $region59: #{tpu_custom_call.1} parent=51 // loop_exit
                _
            $region52: #{tpu_custom_call.1} parent=47 // pred_fallthru
              _
            // Predicated region
            $region60: #{tpu_custom_call.1} parent=47 // pred_check
              _
            $region61: #{tpu_custom_call.1} parent=47 // pred_check_branch
              %264 = sbr.rel target = $region63
            $region62: #{tpu_custom_call.1} parent=47 // pred_region
              _
            $region63: #{tpu_custom_call.1} parent=47 // pred_fallthru
              _
          $region48: #{tpu_custom_call.1} parent=43 // pred_fallthru
            _
          %265 = vnop
        $region44: #{tpu_custom_call.1} parent=39 // pred_fallthru
          _
      $region40: #{tpu_custom_call.1} parent=5 // pred_fallthru
        _
      %p266 = scmp.le.s32.totalorder 1, %s18
      %p267 = scmp.lt.s32.totalorder %s18, 3
      %p268 = pnand %p266, %p267
      %p269 = pneg %p268
      // Predicated region
      $region64: #{tpu_custom_call.1} parent=5 // pred_check
        _
      $region65: #{tpu_custom_call.1} parent=5 // pred_check_branch
        %271 = sbr.rel (%p268) target = $region67
      $region66: #{tpu_custom_call.1} parent=5 // pred_region
        %s272 = ssub.s32 %s18, 1
        %s273 = sand.u32 %s31, 1
        %s274 = sand.u32 %s31, 1
        %s275 = smul.addr %s274, 32
        %s276 = scalar_lea.vmem [#allocation3], %s275
        // Predicated region
        $region68: #{tpu_custom_call.1} parent=66 // pred_check
          %p277 = pneg %p44
        $region69: #{tpu_custom_call.1} parent=66 // pred_check_branch
          %279 = sbr.rel (%p277) target = $region71
        $region70: #{tpu_custom_call.1} parent=66 // pred_region
          _
        $region71: #{tpu_custom_call.1} parent=66 // pred_fallthru
          _
        %s280 = sand.u32 %s31, 1
        %s281 = sand.u32 %s31, 1
        %s282 = smul.addr %s281, 32
        %s283 = scalar_lea.vmem [#allocation3], %s282
        %p284 = pneg %p44
        %p285 = pneg %p41
        %p286 = pneg %p65
        %p287 = pneg %p62
        %p288 = pneg %p86
        %p289 = pneg %p83
        %p290 = pneg %p107
        %p291 = pneg %p104
        %p292 = pneg %p128
        %p293 = pneg %p125
        %p294 = pneg %p149
        %p295 = pneg %p146
        %p296 = pneg %p170
        %p297 = pneg %p167
        %p298 = pneg %p196
        %p299 = pneg %p193
        %s300 = sand.u32 %s183, 1
        %s301 = scalar_lea.sflag [#allocation5], %s300
        %s302 = sand.u32 %s183, 1
        %s303 = smul.addr %s302, 2
        %s304 = scalar_lea.vmem [#allocation4], %s303
        %s305 = smul.u32 2, %s23
        %s306 = smul.u32 2, %s23
        %v307 = vld [vmem:[%s1] sm:$0xff]
        %v308 = vld [vmem:[%s1 + $0x8] sm:$0xff]
        %v309 = vld [vmem:[%s1 + $0x10] sm:$0xff]
        %v310 = vld [vmem:[%s1 + $0x18] sm:$0xff]
        %v311 = vld [vmem:[%s276] sm:$0xff]
        %v312 = vld [vmem:[%s276 + $0x8] sm:$0xff]
        %v313 = vld [vmem:[%s276 + $0x10] sm:$0xff]
        %v314 = vld [vmem:[%s276 + $0x18] sm:$0xff]
        %v315 = vld [vmem:[%s2] sm:$0xff]
        %v316 = vld [vmem:[%s2 + $0x8] sm:$0xff]
        %v317 = vld [vmem:[%s2 + $0x10] sm:$0xff]
        %v318 = vld [vmem:[%s2 + $0x18] sm:$0xff]
        %320 = vset.pattern.permute.xlu0 0
        %321 = vperm.xlu0 %320, %v315
        %v322 = vpop.permute.xlu0 %321
        %325 = vset.pattern.permute.xlu0 0
        %326 = vperm.xlu0 %325, %v316
        %v327 = vpop.permute.xlu0 %326
        %330 = vset.pattern.permute.xlu0 0
        %331 = vperm.xlu0 %330, %v317
        %v332 = vpop.permute.xlu0 %331
        %335 = vset.pattern.permute.xlu0 0
        %336 = vperm.xlu0 %335, %v318
        %v337 = vpop.permute.xlu0 %336
        %vm339 = vcmask 130048
        %v341 = vsel %vm339, %v307, 0
        %v344 = vsel %vm339, %v308, 0
        %v347 = vsel %vm339, %v309, 0
        %v350 = vsel %vm339, %v310, 0
        %352 = vmatprep.subr.mxu0 0.0
        %353 = vmatpush1.msra.mxu0 0.0
        %354 = vmatprep.subr.mxu0 0.0
        %355 = vmatpush1.msra.mxu0 0.0
        %356 = vmatprep.subr.mxu0 0.0
        %357 = vmatpush1.msra.mxu0 0.0
        %358 = vmatprep.subr.mxu0 0.0
        %359 = vmatpush1.msra.mxu0 0.0
        %360 = vmatprep.subr.mxu0 0.0
        %361 = vmatpush1.msra.mxu0 0.0
        %362 = vmatprep.subr.mxu0 0.0
        %363 = vmatpush1.msra.mxu0 0.0
        %364 = vmatprep.subr.mxu0 0.0
        %365 = vmatpush1.msra.mxu0 0.0
        %366 = vmatprep.subr.mxu0 0.0
        %367 = vmatpush1.msra.mxu0 0.0
        %368 = vmatprep.subr.mxu0 0.0
        %369 = vmatpush1.msra.mxu0 0.0
        %370 = vmatprep.subr.mxu0 0.0
        %371 = vmatpush1.msra.mxu0 0.0
        %372 = vmatprep.subr.mxu0 0.0
        %373 = vmatpush1.msra.mxu0 0.0
        %374 = vmatprep.subr.mxu0 0.0
        %375 = vmatpush1.msra.mxu0 0.0
        %376 = vmatprep.subr.mxu0 0.0
        %377 = vmatpush1.msra.mxu0 0.0
        %378 = vmatprep.subr.mxu0 0.0
        %379 = vmatpush1.msra.mxu0 0.0
        %380 = vmatprep.subr.mxu0 %v314
        %381 = vmatpush1.msra.mxu0 %v313
        %382 = vmatprep.subr.mxu0 %v312
        %383 = vmatpush1.msra.mxu0 %v311
        %384 = vmatprep.subr.mxu0 0.0
        %385 = vmatpush2.msra.mxu0 0.0
        %386 = vmatprep.subr.mxu0 0.0
        %387 = vmatpush2.msra.mxu0 0.0
        %388 = vmatprep.subr.mxu0 0.0
        %389 = vmatpush2.msra.mxu0 0.0
        %390 = vmatprep.subr.mxu0 0.0
        %391 = vmatpush2.msra.mxu0 0.0
        %392 = vmatprep.subr.mxu0 0.0
        %393 = vmatpush2.msra.mxu0 0.0
        %394 = vmatprep.subr.mxu0 0.0
        %395 = vmatpush2.msra.mxu0 0.0
        %396 = vmatprep.subr.mxu0 0.0
        %397 = vmatpush2.msra.mxu0 0.0
        %398 = vmatprep.subr.mxu0 0.0
        %399 = vmatpush2.msra.mxu0 0.0
        %400 = vmatprep.subr.mxu0 0.0
        %401 = vmatpush2.msra.mxu0 0.0
        %402 = vmatprep.subr.mxu0 0.0
        %403 = vmatpush2.msra.mxu0 0.0
        %404 = vmatprep.subr.mxu0 0.0
        %405 = vmatpush2.msra.mxu0 0.0
        %406 = vmatprep.subr.mxu0 0.0
        %407 = vmatpush2.msra.mxu0 0.0
        %408 = vmatprep.subr.mxu0 0.0
        %409 = vmatpush2.msra.mxu0 0.0
        %410 = vmatprep.subr.mxu0 0.0
        %411 = vmatpush2.msra.mxu0 0.0
        %412 = vmatprep.subr.mxu0 0.0
        %413 = vmatpush2.msra.mxu0 0.0
        %414 = vmatprep.subr.mxu0 0.0
        %415 = vmatpush2.msra.mxu0 0.0
        %416 = vmatprep.mubr.f32.mxu0 0.0
        %417 = vmatmul.mubr.f32.gmra.mxu0 %v341
        %v418 = vpop.f32.mrf.mxu0
        %v419 = vadd.f32 %v322, %v418
        %v420 = vpop.f32.mrf.mxu0
        %v421 = vadd.f32 %v322, %v420
        %422 = vmatprep.mubr.f32.mxu0 0.0
        %423 = vmatmul.mubr.f32.gmra.mxu0 %v344
        %v424 = vpop.f32.mrf.mxu0
        %v425 = vadd.f32 %v327, %v424
        %v426 = vpop.f32.mrf.mxu0
        %v427 = vadd.f32 %v327, %v426
        %428 = vmatprep.mubr.f32.mxu0 0.0
        %429 = vmatmul.mubr.f32.gmra.mxu0 %v347
        %v430 = vpop.f32.mrf.mxu0
        %v431 = vadd.f32 %v332, %v430
        %v432 = vpop.f32.mrf.mxu0
        %v433 = vadd.f32 %v332, %v432
        %434 = vmatprep.mubr.f32.mxu0 0.0
        %435 = vmatmul.mubr.f32.gmra.mxu0 %v350
        %v436 = vpop.f32.mrf.mxu0
        %v437 = vadd.f32 %v337, %v436
        %v438 = vpop.f32.mrf.mxu0
        %v439 = vadd.f32 %v337, %v438
        %440 = vdwg.mxu0
        %v441 = vmax.f32 %v419, 0.0
        %v442 = vmax.f32 %v421, 0.0
        %v443 = vmax.f32 %v425, 0.0
        %v444 = vmax.f32 %v427, 0.0
        %v445 = vmax.f32 %v431, 0.0
        %v446 = vmax.f32 %v433, 0.0
        %v447 = vmax.f32 %v437, 0.0
        %v448 = vmax.f32 %v439, 0.0
        %v449 = vld [vmem:[%s3] sm:$0xff]
        %v450 = vld [vmem:[%s3 + $0x8] sm:$0xff]
        %v451 = vld [vmem:[%s3 + $0x10] sm:$0xff]
        %v452 = vld [vmem:[%s3 + $0x18] sm:$0xff]
        %v453 = vld [vmem:[%s4] sm:$0xff]
        %v454 = vld [vmem:[%s4 + $0x8] sm:$0xff]
        %v455 = vld [vmem:[%s4 + $0x10] sm:$0xff]
        %v456 = vld [vmem:[%s4 + $0x18] sm:$0xff]
        %458 = vset.pattern.permute.xlu0 0
        %459 = vperm.xlu0 %458, %v453
        %v460 = vpop.permute.xlu0 %459
        %463 = vset.pattern.permute.xlu0 0
        %464 = vperm.xlu0 %463, %v454
        %v465 = vpop.permute.xlu0 %464
        %468 = vset.pattern.permute.xlu0 0
        %469 = vperm.xlu0 %468, %v455
        %v470 = vpop.permute.xlu0 %469
        %473 = vset.pattern.permute.xlu0 0
        %474 = vperm.xlu0 %473, %v456
        %v475 = vpop.permute.xlu0 %474
        %vm477 = vcmask 261120
        %v479 = vsel %vm477, %v449, 0
        %v482 = vsel %vm477, %v450, 0
        %v485 = vsel %vm477, %v451, 0
        %v488 = vsel %vm477, %v452, 0
        %490 = vmatprep.subr.mxu0 0.0
        %491 = vmatpush1.msra.mxu0 0.0
        %492 = vmatprep.subr.mxu0 0.0
        %493 = vmatpush1.msra.mxu0 0.0
        %494 = vmatprep.subr.mxu0 0.0
        %495 = vmatpush1.msra.mxu0 0.0
        %496 = vmatprep.subr.mxu0 0.0
        %497 = vmatpush1.msra.mxu0 0.0
        %498 = vmatprep.subr.mxu0 0.0
        %499 = vmatpush1.msra.mxu0 0.0
        %500 = vmatprep.subr.mxu0 0.0
        %501 = vmatpush1.msra.mxu0 0.0
        %502 = vmatprep.subr.mxu0 0.0
        %503 = vmatpush1.msra.mxu0 0.0
        %504 = vmatprep.subr.mxu0 0.0
        %505 = vmatpush1.msra.mxu0 0.0
        %506 = vmatprep.subr.mxu0 0.0
        %507 = vmatpush1.msra.mxu0 0.0
        %508 = vmatprep.subr.mxu0 0.0
        %509 = vmatpush1.msra.mxu0 0.0
        %510 = vmatprep.subr.mxu0 0.0
        %511 = vmatpush1.msra.mxu0 0.0
        %512 = vmatprep.subr.mxu0 0.0
        %513 = vmatpush1.msra.mxu0 0.0
        %514 = vmatprep.subr.mxu0 %v448
        %515 = vmatpush1.msra.mxu0 %v447
        %516 = vmatprep.subr.mxu0 %v446
        %517 = vmatpush1.msra.mxu0 %v445
        %518 = vmatprep.subr.mxu0 %v444
        %519 = vmatpush1.msra.mxu0 %v443
        %520 = vmatprep.subr.mxu0 %v442
        %521 = vmatpush1.msra.mxu0 %v441
        %522 = vmatprep.subr.mxu0 0.0
        %523 = vmatpush2.msra.mxu0 0.0
        %524 = vmatprep.subr.mxu0 0.0
        %525 = vmatpush2.msra.mxu0 0.0
        %526 = vmatprep.subr.mxu0 0.0
        %527 = vmatpush2.msra.mxu0 0.0
        %528 = vmatprep.subr.mxu0 0.0
        %529 = vmatpush2.msra.mxu0 0.0
        %530 = vmatprep.subr.mxu0 0.0
        %531 = vmatpush2.msra.mxu0 0.0
        %532 = vmatprep.subr.mxu0 0.0
        %533 = vmatpush2.msra.mxu0 0.0
        %534 = vmatprep.subr.mxu0 0.0
        %535 = vmatpush2.msra.mxu0 0.0
        %536 = vmatprep.subr.mxu0 0.0
        %537 = vmatpush2.msra.mxu0 0.0
        %538 = vmatprep.subr.mxu0 0.0
        %539 = vmatpush2.msra.mxu0 0.0
        %540 = vmatprep.subr.mxu0 0.0
        %541 = vmatpush2.msra.mxu0 0.0
        %542 = vmatprep.subr.mxu0 0.0
        %543 = vmatpush2.msra.mxu0 0.0
        %544 = vmatprep.subr.mxu0 0.0
        %545 = vmatpush2.msra.mxu0 0.0
        %546 = vmatprep.subr.mxu0 0.0
        %547 = vmatpush2.msra.mxu0 0.0
        %548 = vmatprep.subr.mxu0 0.0
        %549 = vmatpush2.msra.mxu0 0.0
        %550 = vmatprep.subr.mxu0 0.0
        %551 = vmatpush2.msra.mxu0 0.0
        %552 = vmatprep.subr.mxu0 0.0
        %553 = vmatpush2.msra.mxu0 0.0
        %554 = vmatprep.mubr.f32.mxu0 0.0
        %555 = vmatmul.mubr.f32.gmra.mxu0 %v479
        %v556 = vpop.f32.mrf.mxu0
        %v557 = vadd.f32 %v460, %v556
        %v558 = vpop.f32.mrf.mxu0
        %v559 = vadd.f32 %v460, %v558
        %560 = vmatprep.mubr.f32.mxu0 0.0
        %561 = vmatmul.mubr.f32.gmra.mxu0 %v482
        %v562 = vpop.f32.mrf.mxu0
        %v563 = vadd.f32 %v465, %v562
        %v564 = vpop.f32.mrf.mxu0
        %v565 = vadd.f32 %v465, %v564
        %566 = vmatprep.mubr.f32.mxu0 0.0
        %567 = vmatmul.mubr.f32.gmra.mxu0 %v485
        %v568 = vpop.f32.mrf.mxu0
        %v569 = vadd.f32 %v470, %v568
        %v570 = vpop.f32.mrf.mxu0
        %v571 = vadd.f32 %v470, %v570
        %572 = vmatprep.mubr.f32.mxu0 0.0
        %573 = vmatmul.mubr.f32.gmra.mxu0 %v488
        %v574 = vpop.f32.mrf.mxu0
        %v575 = vadd.f32 %v475, %v574
        %v576 = vpop.f32.mrf.mxu0
        %v577 = vadd.f32 %v475, %v576
        %578 = vdwg.mxu0
        %v579 = vmax.f32 %v557, 0.0
        %v580 = vmax.f32 %v559, 0.0
        %v581 = vmax.f32 %v563, 0.0
        %v582 = vmax.f32 %v565, 0.0
        %v583 = vmax.f32 %v569, 0.0
        %v584 = vmax.f32 %v571, 0.0
        %v585 = vmax.f32 %v575, 0.0
        %v586 = vmax.f32 %v577, 0.0
        %v587 = vld [vmem:[%s5] sm:$0xff]
        %v588 = vld [vmem:[%s5 + $0x8] sm:$0xff]
        %v589 = vld [vmem:[%s5 + $0x10] sm:$0xff]
        %v590 = vld [vmem:[%s5 + $0x18] sm:$0xff]
        %592 = vset.pattern.permute.xlu0 0
        %593 = vperm.xlu0 %592, %v587
        %v594 = vpop.permute.xlu0 %593
        %597 = vset.pattern.permute.xlu0 0
        %598 = vperm.xlu0 %597, %v588
        %v599 = vpop.permute.xlu0 %598
        %602 = vset.pattern.permute.xlu0 0
        %603 = vperm.xlu0 %602, %v589
        %v604 = vpop.permute.xlu0 %603
        %607 = vset.pattern.permute.xlu0 0
        %608 = vperm.xlu0 %607, %v590
        %v609 = vpop.permute.xlu0 %608
        %v611 = vmul.f32 %v579, %v594
        %v612 = vmul.f32 %v580, %v594
        %v613 = vmul.f32 %v581, %v599
        %v614 = vmul.f32 %v582, %v599
        %v615 = vmul.f32 %v583, %v604
        %v616 = vmul.f32 %v584, %v604
        %v617 = vmul.f32 %v585, %v609
        %v618 = vmul.f32 %v586, %v609
        %v619 = vadd.f32 %v611, %v613
        %v620 = vadd.f32 %v619, %v615
        %v621 = vadd.f32 %v620, %v617
        %v622 = vrot.slane %v621, 4
        %v623 = vadd.f32 %v621, %v622
        %v624 = vrot.slane %v623, 2
        %v625 = vadd.f32 %v623, %v624
        %v626 = vrot.slane %v625, 1
        %v627 = vadd.f32 %v625, %v626
        %v628 = vadd.f32 %v612, %v614
        %v629 = vadd.f32 %v628, %v616
        %v630 = vadd.f32 %v629, %v618
        %v631 = vrot.slane %v630, 4
        %v632 = vadd.f32 %v630, %v631
        %v633 = vrot.slane %v632, 2
        %v634 = vadd.f32 %v632, %v633
        %v635 = vrot.slane %v634, 1
        %v636 = vadd.f32 %v634, %v635
        %v637 = vld [vmem:[#allocation2] sm:$0x1]
        %639 = vset.pattern.permute.xlu0 0
        %640 = vperm.xlu0 %639, %v637
        %v641 = vpop.permute.xlu0 %640
        %v643 = vlaneseq
        %v644 = vshrl.u32 %v643, 7
        %v645 = vsub.s32 0, %v644
        %v646 = vrot.slane %v641, %v645
        %v647 = vadd.f32 %v627, %v646
        %v648 = vadd.f32 %v636, %v646
        %v651 = vcombine.low %v647, %v648
        %v653 = vunpack.c.l.s4 1966171168
        %v654 = vunpack.c.0.s8 %v653
        %v655 = vlaneseq
        %v656 = vshrl.u32 %v655, 7
        %v657 = vsub.s32 %v654, %v656
        %v658 = vrot.slane %v651, %v657
        %v660 = vunpack.c.l.s4 1966171168
        %v661 = vunpack.c.0.s8 %v660
        %v662 = vlaneseq
        %v663 = vshrl.u32 %v662, 7
        %v664 = vsub.s32 %v661, %v663
        %v665 = vrot.slane %v658, %v664
        %v667 = vlaneseq
        %vm668 = vcmp.ge.s32.totalorder %v667, 0
        %vm669 = vcmp.lt.s32.totalorder %v667, 256
        %vm670 = vmand %vm668, %vm669
        %671 = vst.msk [vmem:[%s304] sm:$0x3] %vm670, %v665
        %s672 = sand.u32 %s183, 1
        %s673 = scalar_lea.sflag [#allocation5], %s672
        %s674 = sand.u32 %s183, 1
        %s675 = smul.addr %s674, 2
        %s676 = scalar_lea.vmem [#allocation4], %s675
        // Predicated region
        $region72: #{tpu_custom_call.1} parent=66 // pred_check
          %p677 = pneg %p193
        $region73: #{tpu_custom_call.1} parent=66 // pred_check_branch
          %679 = sbr.rel (%p677) target = $region75
        $region74: #{tpu_custom_call.1} parent=66 // pred_region
          %s680 = smul.u32 2, %s23
          %s682 = ssub.s32 32, 32
          %683 = vsyncadd %s673, %s682
          %s684 = smul.addr %s680, 16
          %s685 = scalar_lea.hbm %s7, %s684
          %s687 = sshll.u32 %s676, 4
          %s688 = int_to_ptr.vmem [resolvable:$true] %s687
          %690 = dma.vmem_to_hbm [thread:$0]  %s688, 32, %s685, %s673
        $region75: #{tpu_custom_call.1} parent=66 // pred_fallthru
          _
      $region67: #{tpu_custom_call.1} parent=5 // pred_fallthru
        _
      %p691 = scmp.le.s32.totalorder 2, %s18
      // Predicated region
      $region76: #{tpu_custom_call.1} parent=5 // pred_check
        %p692 = pneg %p691
      $region77: #{tpu_custom_call.1} parent=5 // pred_check_branch
        %694 = sbr.rel (%p692) target = $region79
      $region78: #{tpu_custom_call.1} parent=5 // pred_region
        %s695 = ssub.s32 %s18, 2
        // Predicated region
        $region80: #{tpu_custom_call.1} parent=78 // pred_check
          %p696 = pneg %p199
        $region81: #{tpu_custom_call.1} parent=78 // pred_check_branch
          %698 = sbr.rel (%p696) target = $region83
        $region82: #{tpu_custom_call.1} parent=78 // pred_region
          %s699 = sand.u32 %s184, 1
          %s700 = scalar_lea.sflag [#allocation5], %s699
          %s701 = sand.u32 %s184, 1
          %s702 = smul.addr %s701, 2
          %s703 = scalar_lea.vmem [#allocation4], %s702
          %704 = dma.done %s700, 32
        $region83: #{tpu_custom_call.1} parent=78 // pred_fallthru
          _
      $region79: #{tpu_custom_call.1} parent=5 // pred_fallthru
        _
    $region6: #{tpu_custom_call.1} parent=1 // loop_footer
      %s22 = sadd.s32 1, %s18
    $region7: #{tpu_custom_call.1} parent=1 // loop_footer_branch
      %17 = sbr.rel target = $region3
    $region8: #{tpu_custom_call.1} parent=1 // loop_exit
      _
    %705 = vsyncpa [#allocation5], 1
    %s706 = scalar_lea.sflag [#allocation5], 1
    %707 = vsyncpa %s706, 1

</llo_original>
